<compile_context>
chip_gen: v7x
topology: tpu7x:2x2x1
jax: 0.10.0
libtpu: 0.0.40
codegen_flags: <defaults>
</compile_context>

<pallas_src>
import math

import jax
import jax.numpy as jnp
from jax.experimental import pallas as pl
from jax.experimental.pallas import tpu as pltpu


def _round_up(x: int, m: int) -> int:
    return ((x + m - 1) // m) * m


def listnet_kernel(x_ref, w1_ref, b1_ref, w2_ref, b2_ref, o_ref):
    # x_ref : (TILE_N, F)  bfloat16
    # w1_ref: (F, H)       bfloat16   (transposed nn.Linear weight)
    # b1_ref: (1, H)       float32
    # w2_ref: (1, H)       float32    (second-layer weight as a row)
    # b2_ref: (1, 1)       float32    (SMEM scalar)
    # o_ref : (TILE_N, 1)  float32
    h = jnp.dot(x_ref[...], w1_ref[...],
                preferred_element_type=jnp.float32)        # MXU, f32 accumulate
    h = jnp.maximum(h + b1_ref[...], 0.0)                  # bias + ReLU on VPU (f32)
    # Second "matmul" (H -> 1) as multiply + lane reduction (VPU/XLU, MXU-free).
    o = jnp.sum(h * w2_ref[...], axis=-1, keepdims=True) + b2_ref[0, 0]
    o_ref[...] = o.astype(o_ref.dtype)


def listnet_forward(x, w1, b1, w2, b2, *, tile_n=512):
    """x: (batch, slate, F) float32. Returns logits (batch, slate, 1) float32."""
    batch, slate, feat = x.shape
    hidden = w1.shape[0]
    n = batch * slate

    # Row-tile size: large enough to amortize per-grid-step overhead, small
    # enough that (double-buffered) x tiles fit comfortably in scoped VMEM on
    # every generation (incl. v7x's 64 MiB physical / 32 MiB scoped default).
    tile = min(tile_n, _round_up(n, 8))
    tile = _round_up(tile, 8)
    n_pad = _round_up(n, tile)

    x2 = x.reshape(n, feat)
    if n_pad != n:
        x2 = jnp.pad(x2, ((0, n_pad - n), (0, 0)))

    # bf16 on the heavy streams (x, W1); keep biases / second layer in f32.
    x_bf16 = x2.astype(jnp.bfloat16)
    w1_t = w1.T.astype(jnp.bfloat16)                 # (F, H)
    b1_2 = b1.reshape(1, hidden).astype(jnp.float32)  # (1, H)
    w2_row = w2.reshape(1, hidden).astype(jnp.float32)  # (1, H)
    b2_2 = b2.reshape(1, 1).astype(jnp.float32)       # (1, 1) -> SMEM scalar

    grid = (n_pad // tile,)

    out = pl.pallas_call(
        listnet_kernel,
        out_shape=jax.ShapeDtypeStruct((n_pad, 1), jnp.float32),
        grid_spec=pltpu.PrefetchScalarGridSpec(
            num_scalar_prefetch=0,
            grid=grid,
            in_specs=[
                pl.BlockSpec((tile, feat), lambda i: (i, 0)),     # x tile (pipelined)
                pl.BlockSpec((feat, hidden), lambda i: (0, 0)),   # W1 (VMEM-resident)
                pl.BlockSpec((1, hidden), lambda i: (0, 0)),      # b1
                pl.BlockSpec((1, hidden), lambda i: (0, 0)),      # w2 row
                pl.BlockSpec(memory_space=pltpu.MemorySpace.SMEM),  # b2 scalar
            ],
            out_specs=pl.BlockSpec((tile, 1), lambda i: (i, 0)),
        ),
        compiler_params=pltpu.CompilerParams(
            dimension_semantics=("parallel",),   # independent tiles -> 2 TCs on v7x
            vmem_limit_bytes=32 * 1024 * 1024,
        ),
    )(x_bf16, w1_t, b1_2, w2_row, b2_2)

    # TODO(synk): output stays (TILE_N, 1) (1-lane stores); with feat=32 the
    # store path is a bounded fraction of wall — a lane-dense (1, TILE_N) slab
    # would need an in-kernel transpose.
    return out[:n].reshape(batch, slate, 1)


def init_listnet_params(key, num_input_features, hidden_dim):
    """Deterministic init mimicking torch.nn.Linear (uniform +-1/sqrt(fan_in))."""
    k1, k2, k3, k4 = jax.random.split(key, 4)
    bound1 = 1.0 / math.sqrt(num_input_features)
    bound2 = 1.0 / math.sqrt(hidden_dim)
    w1 = jax.random.uniform(k1, (hidden_dim, num_input_features),
                            minval=-bound1, maxval=bound1, dtype=jnp.float32)
    b1 = jax.random.uniform(k2, (hidden_dim,),
                            minval=-bound1, maxval=bound1, dtype=jnp.float32)
    w2 = jax.random.uniform(k3, (1, hidden_dim),
                            minval=-bound2, maxval=bound2, dtype=jnp.float32)
    b2 = jax.random.uniform(k4, (1,),
                            minval=-bound2, maxval=bound2, dtype=jnp.float32)
    return w1, b1, w2, b2


def _reference(x, w1, b1, w2, b2):
    return jnp.maximum(x @ w1.T + b1, 0.0) @ w2.T + b2


if __name__ == "__main__":
    num_input_features = 32
    hidden_dim = 32

    key = jax.random.PRNGKey(0)
    kp, kx1, kx2 = jax.random.split(key, 3)
    w1, b1, w2, b2 = init_listnet_params(kp, num_input_features, hidden_dim)

    # Small case: single grid step, no padding.
    batch, slate = 2, 8
    x_small = jax.random.normal(kx1, (batch, slate, num_input_features),
                                dtype=jnp.float32)
    logits = listnet_forward(x_small, w1, b1, w2, b2)
    jax.block_until_ready(logits)
    ref = _reference(x_small, w1, b1, w2, b2)
    assert logits.shape == (batch, slate, 1)
    assert jnp.allclose(logits, ref, atol=3e-2, rtol=3e-2), (
        float(jnp.max(jnp.abs(logits - ref))))

    # Larger case: exercises multi-step grid + row padding.
    batch2, slate2 = 4, 200   # n = 800 -> tile 512, padded to 1024, grid=(2,)
    x_big = jax.random.normal(kx2, (batch2, slate2, num_input_features),
                              dtype=jnp.float32)
    logits2 = listnet_forward(x_big, w1, b1, w2, b2)
    jax.block_until_ready(logits2)
    ref2 = _reference(x_big, w1, b1, w2, b2)
    assert logits2.shape == (batch2, slate2, 1)
    assert jnp.allclose(logits2, ref2, atol=3e-2, rtol=3e-2), (
        float(jnp.max(jnp.abs(logits2 - ref2))))

    print("KERNEL_OK")
</pallas_src>

<mosaic_0001>
module attributes {stable_mosaic.version = 11 : i64} {
  func.func @listnet_kernel(%arg0: i32, %arg1: memref<16x32xbf16, #tpu.memory_space<vmem>>, %arg2: memref<32x32xbf16, #tpu.memory_space<vmem>>, %arg3: memref<1x32xf32, #tpu.memory_space<vmem>>, %arg4: memref<1x32xf32, #tpu.memory_space<vmem>>, %arg5: memref<1x1xf32, #tpu.memory_space<smem>>, %arg6: memref<16x1xf32, #tpu.memory_space<vmem>>) attributes {dimension_semantics = [#tpu.dimension_semantics<parallel>], iteration_bounds = array<i64: 1>, scalar_prefetch = 0 : i64, scratch_operands = 0 : i64, tpu.core_type = #tpu.core_type<tc>, window_params = [{transform_indices = @transform_0, window_bounds = array<i64: 16, 32>}, {pipeline_mode = #tpu.pipeline_mode<synchronous>, transform_indices = @transform_1, window_bounds = array<i64: 32, 32>}, {pipeline_mode = #tpu.pipeline_mode<synchronous>, transform_indices = @transform_2, window_bounds = array<i64: 1, 32>}, {pipeline_mode = #tpu.pipeline_mode<synchronous>, transform_indices = @transform_3, window_bounds = array<i64: 1, 32>}, {transform_indices = @transform_4, window_bounds = array<i64: 1, 1>}, {transform_indices = @transform_5, window_bounds = array<i64: 16, 1>}]} {
    %c0 = arith.constant 0 : index
    %c0_0 = arith.constant 0 : index
    %0 = vector.load %arg1[%c0, %c0_0] : memref<16x32xbf16, #tpu.memory_space<vmem>>, vector<16x32xbf16>
    %c0_1 = arith.constant 0 : index
    %c0_2 = arith.constant 0 : index
    %1 = vector.load %arg2[%c0_1, %c0_2] : memref<32x32xbf16, #tpu.memory_space<vmem>>, vector<32x32xbf16>
    %cst = arith.constant dense<0.000000e+00> : vector<16x32xf32>
    %2 = tpu.matmul %0, %1, %cst {dimension_numbers = #tpu.dot_dimension_numbers<[1], [0], [0], [1], [0, 0, 1, 1], [], []>} : vector<16x32xbf16>, vector<32x32xbf16>, vector<16x32xf32> -> vector<16x32xf32>
    %c0_3 = arith.constant 0 : index
    %c0_4 = arith.constant 0 : index
    %3 = vector.load %arg3[%c0_3, %c0_4] : memref<1x32xf32, #tpu.memory_space<vmem>>, vector<1x32xf32>
    %4 = vector.broadcast %3 : vector<1x32xf32> to vector<16x32xf32>
    %5 = arith.addf %2, %4 : vector<16x32xf32>
    %cst_5 = arith.constant 0.000000e+00 : f32
    %6 = vector.broadcast %cst_5 : f32 to vector<16x32xf32>
    %7 = arith.maximumf %5, %6 : vector<16x32xf32>
    %c0_6 = arith.constant 0 : index
    %c0_7 = arith.constant 0 : index
    %8 = vector.load %arg4[%c0_6, %c0_7] : memref<1x32xf32, #tpu.memory_space<vmem>>, vector<1x32xf32>
    %9 = vector.broadcast %8 : vector<1x32xf32> to vector<16x32xf32>
    %10 = arith.mulf %7, %9 : vector<16x32xf32>
    %cst_8 = arith.constant dense<0.000000e+00> : vector<16xf32>
    %11 = vector.multi_reduction <add>, %10, %cst_8 [1] : vector<16x32xf32> to vector<16xf32>
    %12 = vector.shape_cast %11 : vector<16xf32> to vector<16x1xf32>
    %c0_9 = arith.constant 0 : index
    %c0_10 = arith.constant 0 : index
    %13 = memref.load %arg5[%c0_9, %c0_10] : memref<1x1xf32, #tpu.memory_space<smem>>
    %14 = vector.broadcast %13 : f32 to vector<16x1xf32>
    %15 = arith.addf %12, %14 : vector<16x1xf32>
    %c0_11 = arith.constant 0 : index
    %c0_12 = arith.constant 0 : index
    %16 = vector.load %arg6[%c0_11, %c0_12] : memref<16x1xf32, #tpu.memory_space<vmem>>, vector<16x1xf32>
    tpu.vector_store %arg6[%c0_11, %c0_12], %15 {strides = array<i32>} : memref<16x1xf32, #tpu.memory_space<vmem>>, vector<16x1xf32>,
    return
  }
  func.func @transform_0(%arg0: i32) -> (i32, i32) {
    %c0_i32 = arith.constant 0 : i32
    %c0_i32_0 = arith.constant 0 : i32
    return %arg0, %c0_i32 : i32, i32
  }
  func.func @transform_1(%arg0: i32) -> (i32, i32) {
    %c0_i32 = arith.constant 0 : i32
    %c0_i32_0 = arith.constant 0 : i32
    %c0_i32_1 = arith.constant 0 : i32
    return %c0_i32, %c0_i32_0 : i32, i32
  }
  func.func @transform_2(%arg0: i32) -> (i32, i32) {
    %c0_i32 = arith.constant 0 : i32
    %c0_i32_0 = arith.constant 0 : i32
    %c0_i32_1 = arith.constant 0 : i32
    return %c0_i32, %c0_i32_0 : i32, i32
  }
  func.func @transform_3(%arg0: i32) -> (i32, i32) {
    %c0_i32 = arith.constant 0 : i32
    %c0_i32_0 = arith.constant 0 : i32
    %c0_i32_1 = arith.constant 0 : i32
    return %c0_i32, %c0_i32_0 : i32, i32
  }
  func.func @transform_4(%arg0: i32) -> (i32, i32) {
    %c0_i32 = arith.constant 0 : i32
    %c0_i32_0 = arith.constant 0 : i32
    %c0_i32_1 = arith.constant 0 : i32
    return %c0_i32, %c0_i32_0 : i32, i32
  }
  func.func @transform_5(%arg0: i32) -> (i32, i32) {
    %c0_i32 = arith.constant 0 : i32
    %c0_i32_0 = arith.constant 0 : i32
    return %arg0, %c0_i32 : i32, i32
  }
}

</mosaic_0001>

<llo_original>
// kernel: tpu_custom_call.1
$region0: #{tpu_custom_call.1}
  #allocation0 [shape = 'u32[]', space=smem, size = 0x4, offset = 0x4, fixed_abs, tag = 'smem constant byte address 0x4 - core index']
  #allocation1 [shape = 'u32[144,128]{1,0:T(1,128)}', space=vmem, size = 0x12000, scoped, tag = 'internal scratch']
  #allocation2 [shape = 'f32[1,1]{1,0:T(1,128)S(6)}', space=smem, size = 0x200, scoped, tag = 'scoped memory for tpu_custom_call.1']
  %s0 = inlined_call_operand.hbm [shape: bf16[16,32], index: 0, kind: input, shape index: {}]
  %s1 = inlined_call_operand.hbm [shape: bf16[32,32], index: 1, kind: input, shape index: {}]
  %s2 = inlined_call_operand.vmem [shape: f32[1,32], index: 2, kind: input, shape index: {}]
  %s3 = inlined_call_operand.vmem [shape: f32[1,32], index: 3, kind: input, shape index: {}]
  %s4 = inlined_call_operand.<no memory space> [shape: f32[1,1], index: 4, kind: input, shape index: {}]
  %s5 = inlined_call_operand.vmem [shape: f32[16,1], index: 5, kind: output, shape index: {}]
  %s6 = sld [smem:[#allocation0]]
  $region38: #{tpu_custom_call.1} parent=0
    _
  %s8 = ssub.s32 1, %s6
  %s9 = scalar_select 0, %s8, %s6
  %10 = sst [smem:[#allocation2]] %s4
  $region1: #{tpu_custom_call.1} parent=0
    #allocation3 [shape = 'u8[4096]{0}', space=vmem, size = 0x1000, scoped, tag = 'input window, operand 0, single buffered']
    #allocation4 [shape = 's32[1]{0}', space=sflag, size = 0x4, scoped, tag = 'scoped memory for tpu_custom_call.1']
    #allocation5 [shape = 'u8[8192]{0}', space=vmem, size = 0x2000, scoped, tag = 'input window, operand 1, single buffered']
    #allocation6 [shape = 's32[1]{0}', space=sflag, size = 0x4, scoped, tag = 'scoped memory for tpu_custom_call.1']
    %11 = vsyncpa [#allocation4], 0
    %12 = vsyncpa [#allocation6], 0
    // Predicated region
    $region2: #{tpu_custom_call.1} parent=1 // pred_check
      _
    $region3: #{tpu_custom_call.1} parent=1 // pred_check_branch
      %14 = sbr.rel (0) target = $region5
    $region4: #{tpu_custom_call.1} parent=1 // pred_region
      %s16 = ssub.s32 128, 128
      %17 = vsyncadd [#allocation4], %s16
      %s18 = sshll.u32 [#allocation3], 4
      %s19 = int_to_ptr.vmem [resolvable:$true] %s18
      %24 = dma.hbm_to_vmem [thread:$0]  %s0, 128, %s19, [#allocation4], 64, 64, 4
    $region5: #{tpu_custom_call.1} parent=1 // pred_fallthru
      _
    // Predicated region
    $region6: #{tpu_custom_call.1} parent=1 // pred_check
      _
    $region7: #{tpu_custom_call.1} parent=1 // pred_check_branch
      %26 = sbr.rel (0) target = $region9
    $region8: #{tpu_custom_call.1} parent=1 // pred_region
      %s28 = ssub.s32 256, 256
      %29 = vsyncadd [#allocation6], %s28
      %s30 = sshll.u32 [#allocation5], 4
      %s31 = int_to_ptr.vmem [resolvable:$true] %s30
      %36 = dma.hbm_to_vmem [thread:$0]  %s1, 256, %s31, [#allocation6], 64, 64, 4
    $region9: #{tpu_custom_call.1} parent=1 // pred_fallthru
      _
    // Predicated region
    $region10: #{tpu_custom_call.1} parent=1 // pred_check
      _
    $region11: #{tpu_custom_call.1} parent=1 // pred_check_branch
      %38 = sbr.rel (0) target = $region13
    $region12: #{tpu_custom_call.1} parent=1 // pred_region
      _
    $region13: #{tpu_custom_call.1} parent=1 // pred_fallthru
      _
    // Predicated region
    $region14: #{tpu_custom_call.1} parent=1 // pred_check
      _
    $region15: #{tpu_custom_call.1} parent=1 // pred_check_branch
      %40 = sbr.rel (0) target = $region17
    $region16: #{tpu_custom_call.1} parent=1 // pred_region
      _
    $region17: #{tpu_custom_call.1} parent=1 // pred_fallthru
      _
    // Predicated region
    $region18: #{tpu_custom_call.1} parent=1 // pred_check
      _
    $region19: #{tpu_custom_call.1} parent=1 // pred_check_branch
      %42 = sbr.rel (0) target = $region21
    $region20: #{tpu_custom_call.1} parent=1 // pred_region
      _
    $region21: #{tpu_custom_call.1} parent=1 // pred_fallthru
      _
    // Predicated region
    $region22: #{tpu_custom_call.1} parent=1 // pred_check
      _
    $region23: #{tpu_custom_call.1} parent=1 // pred_check_branch
      %44 = sbr.rel (0) target = $region25
    $region24: #{tpu_custom_call.1} parent=1 // pred_region
      %45 = dma.done [#allocation4], 128
    $region25: #{tpu_custom_call.1} parent=1 // pred_fallthru
      _
    // Predicated region
    $region26: #{tpu_custom_call.1} parent=1 // pred_check
      _
    $region27: #{tpu_custom_call.1} parent=1 // pred_check_branch
      %47 = sbr.rel (0) target = $region29
    $region28: #{tpu_custom_call.1} parent=1 // pred_region
      %48 = dma.done [#allocation6], 256
    $region29: #{tpu_custom_call.1} parent=1 // pred_fallthru
      _
    %v50 = vld [vmem:[#allocation3] sm:$0xf]
    %v51 = vld [vmem:[#allocation3 + $0x4] sm:$0xf]
    %v52 = vld [vmem:[#allocation5] sm:$0xf]
    %v53 = vld [vmem:[#allocation5 + $0x4] sm:$0xf]
    %v54 = vld [vmem:[#allocation5 + $0x8] sm:$0xf]
    %v55 = vld [vmem:[#allocation5 + $0xc] sm:$0xf]
    %v56 = vld [vmem:[%s2] sm:$0x1]
    %v58 = vlaneseq
    %v59 = vshrl.u32 %v58, 7
    %v60 = vsub.s32 0, %v59
    %v61 = vrot.slane %v56, %v60
    %v65 = vunpack.c.l.b16 %v50
    %v66 = vunpack.c.l.b16 %v51
    %v67 = vpack.c.b16 %v66, %v65
    %v72 = vunpack.c.l.b16 %v52
    %v73 = vunpack.c.l.b16 %v53
    %v74 = vunpack.c.l.b16 %v54
    %v75 = vunpack.c.l.b16 %v55
    %v76 = vpack.c.b16 %v73, %v72
    %v77 = vpack.c.b16 %v75, %v74
    %vm80 = vcmask 261120
    %v82 = vsel %vm80, %v67, 0
    %84 = vmatprep.subr.bf16.mxu0 0
    %85 = vmatpush1.bf16.msra.mxu0 %v76
    %86 = vmatprep.subr.bf16.mxu0 0
    %87 = vmatpush1.bf16.msra.mxu0 %v77
    %88 = vmatprep.subr.bf16.mxu0 0
    %89 = vmatpush1.bf16.msra.mxu0 0
    %90 = vmatprep.subr.bf16.mxu0 0
    %91 = vmatpush1.bf16.msra.mxu0 0
    %92 = vmatprep.subr.bf16.mxu0 0
    %93 = vmatpush1.bf16.msra.mxu0 0
    %94 = vmatprep.subr.bf16.mxu0 0
    %95 = vmatpush1.bf16.msra.mxu0 0
    %96 = vmatprep.subr.bf16.mxu0 0
    %97 = vmatpush1.bf16.msra.mxu0 0
    %98 = vmatprep.subr.bf16.mxu0 0
    %99 = vmatpush1.bf16.msra.mxu0 0
    %100 = vmatprep.subr.bf16.mxu0 0
    %101 = vmatpush1.bf16.msra.mxu0 0
    %102 = vmatprep.subr.bf16.mxu0 0
    %103 = vmatpush1.bf16.msra.mxu0 0
    %104 = vmatprep.subr.bf16.mxu0 0
    %105 = vmatpush1.bf16.msra.mxu0 0
    %106 = vmatprep.subr.bf16.mxu0 0
    %107 = vmatpush1.bf16.msra.mxu0 0
    %108 = vmatprep.subr.bf16.mxu0 0
    %109 = vmatpush1.bf16.msra.mxu0 0
    %110 = vmatprep.subr.bf16.mxu0 0
    %111 = vmatpush1.bf16.msra.mxu0 0
    %112 = vmatprep.subr.bf16.mxu0 0
    %113 = vmatpush1.bf16.msra.mxu0 0
    %114 = vmatprep.subr.bf16.mxu0 0
    %115 = vmatpush1.bf16.msra.mxu0 0
    %116 = vmatprep.mubr.bf16.mxu0 0
    %117 = vmatmul.mubr.bf16.gmra.mrb[0].mxu0 %v82
    %v118 = vpop.f32.mrb[0].mxu0
    %v119 = vadd.f32 %v61, %v118
    %v120 = vpop.f32.mrb[0].mxu0
    %v121 = vpop.f32.mrb[0].mxu0
    %v122 = vadd.f32 %v61, %v121
    %v123 = vpop.f32.mrb[0].mxu0
    %124 = vdwg.mxu0
    %v125 = vmax.f32 %v119, 0.0
    %v126 = vmax.f32 %v122, 0.0
    %v127 = vld [vmem:[%s3] sm:$0x1]
    %v129 = vlaneseq
    %v130 = vshrl.u32 %v129, 7
    %v131 = vsub.s32 0, %v130
    %v132 = vrot.slane %v127, %v131
    %v134 = vmul.f32 %v125, %v132
    %v135 = vmul.f32 %v126, %v132
    %v136 = vsel %vm80, %v134, 0.0
    %137 = vadd.xlane.f32.xlu0 %v136
    %v138 = vpop.xlane.xlu0 %137
    %v139 = vsel %vm80, %v135, 0.0
    %140 = vadd.xlane.f32.xlu0 %v139
    %v141 = vpop.xlane.xlu0 %140
    %s142 = sld [smem:[#allocation2]]
    %v143 = vstv %s142
    %v144 = vadd.f32 %v138, %v143
    %v145 = vadd.f32 %v141, %v143
    %vm146 = vcmask 7168
    %147 = vst.msk [vmem:[%s5] sm:$0xff] %vm146, %v144
    %148 = vst.msk [vmem:[%s5 + $0x8] sm:$0xff] %vm146, %v145
    // Predicated region
    $region30: #{tpu_custom_call.1} parent=1 // pred_check
      _
    $region31: #{tpu_custom_call.1} parent=1 // pred_check_branch
      %150 = sbr.rel (0) target = $region33
    $region32: #{tpu_custom_call.1} parent=1 // pred_region
      _
    $region33: #{tpu_custom_call.1} parent=1 // pred_fallthru
      _
    // Predicated region
    $region34: #{tpu_custom_call.1} parent=1 // pred_check
      _
    $region35: #{tpu_custom_call.1} parent=1 // pred_check_branch
      %152 = sbr.rel (0) target = $region37
    $region36: #{tpu_custom_call.1} parent=1 // pred_region
      _
    $region37: #{tpu_custom_call.1} parent=1 // pred_fallthru
      _
    %153 = vsyncpa [#allocation4], 1
    %154 = vsyncpa [#allocation6], 1

</llo_original>
